<compile_context>
chip_gen: v6e
topology: v6e:2x2x1
jax: 0.10.0
libtpu: 0.0.40
codegen_flags: <defaults>
</compile_context>

<pallas_src>
import jax
import jax.numpy as jnp
from jax.experimental import pallas as pl
from jax.experimental.pallas import tpu as pltpu


_LANES = 128
_TARGET_BLOCK_BYTES = 4 << 20                       # ~4 MiB pred block / step
_MAX_TILE_ROWS = _TARGET_BLOCK_BYTES // (_LANES * 4)  # 8192 rows (f32 sizing)
_VMEM_LIMIT = 40 << 20                              # safe on v5e / v6e / v7x


def _round_up(x, m):
    return ((x + m - 1) // m) * m


def _cdiv(a, b):
    return -(-a // b)


def _choose_tile_rows(total_rows):
    """Rows per tile: multiple of 8, ~4 MiB blocks, >=2 tiles when possible."""
    if total_rows <= 8:
        return 8
    half = _cdiv(total_rows, 2)          # at least 2 tiles (v7x megacore)
    return max(8, min(_MAX_TILE_ROWS, _round_up(half, 8)))


def _sequence_loss_kernel(pred_ref, gt_ref, mask_ref, out_ref):
    # pred_ref : (1, TILE_ROWS, 128) in its storage dtype (f32 or bf16)
    # gt_ref   : (TILE_ROWS, 128) f32, resident across the inner pred axis
    # mask_ref : (TILE_ROWS, 128) f32 (0/1), resident across the inner axis
    # out_ref  : (1, 1, 8, 128) f32 — unweighted partial for this (tile, pred)
    pred = pred_ref[0].astype(jnp.float32)
    diff = jnp.abs(pred - gt_ref[...])
    # select, not multiply: zero mask kills NaN/garbage from padded / partial
    # edge blocks of the prediction stream.
    val = jnp.where(mask_ref[...] > 0.0, diff, 0.0)
    # Fold into a single (8,128) vreg: the reshape groups exactly one (8,128)
    # tile per leading index, so this is one VALU add per vreg of work.
    out_ref[0, 0] = jnp.sum(val.reshape(-1, 8, _LANES), axis=0)


def sequence_loss(flow_preds, flow_gt, valid, gamma=0.8, max_flow=400.0,
                  tile_rows=None):
    """Pallas TPU implementation of SequenceLoss.forward.

    flow_preds : list/tuple of (B, C, H, W) arrays, or a pre-stacked
                 (N, B, C, H, W) array (preferred — avoids one HBM copy).
    flow_gt    : (B, C, H, W)
    valid      : (B, 1, H, W)
    returns scalar float32 loss
    """
    if isinstance(flow_preds, (list, tuple)):
        preds = jnp.stack(flow_preds, axis=0)   # unavoidable copy for list input
    else:
        preds = flow_preds
    n = preds.shape[0]
    B, C, H, W = flow_gt.shape
    L = B * C * H * W

    # ---- hoisted preprocessing (runs once, plain XLA) -----------------------
    gt = jnp.asarray(flow_gt, jnp.float32)
    gt = jnp.where(jnp.isnan(gt), jnp.float32(0.0), gt)            # NaN scrub
    mag_sq = jnp.sum(gt * gt, axis=1)                              # (B, H, W)
    val = jnp.squeeze(jnp.asarray(valid, jnp.float32), axis=1)     # (B, H, W)
    mask = jnp.logical_and(val >= 0.5,
                           mag_sq < jnp.float32(float(max_flow) ** 2))
    mask = jnp.broadcast_to(mask[:, None, :, :], (B, C, H, W)).astype(jnp.float32)

    # ---- flatten to dense (rows, 128) slabs ---------------------------------
    rows = _cdiv(L, _LANES)
    t_rows = (_choose_tile_rows(rows) if tile_rows is None
              else max(8, _round_up(int(tile_rows), 8)))
    num_tiles = _cdiv(rows, t_rows)
    rows_pad = num_tiles * t_rows

    preds = preds.reshape(n, L)
    if L % _LANES == 0:
        preds = preds.reshape(n, rows, _LANES)          # copy-free reshape
    else:
        # TODO(synk): lane-unaligned B*C*H*W costs one zero-pad copy of preds.
        preds = jnp.pad(preds, ((0, 0), (0, rows * _LANES - L)))
        preds = preds.reshape(n, rows, _LANES)

    pad = rows_pad * _LANES - L                 # gt/mask padded (cheap: 1/N each)
    gt = jnp.pad(gt.reshape(L), (0, pad)).reshape(rows_pad, _LANES)
    mask = jnp.pad(mask.reshape(L), (0, pad)).reshape(rows_pad, _LANES)

    partials = pl.pallas_call(
        _sequence_loss_kernel,
        out_shape=jax.ShapeDtypeStruct((num_tiles, n, 8, _LANES), jnp.float32),
        grid_spec=pltpu.PrefetchScalarGridSpec(
            num_scalar_prefetch=0,
            grid=(num_tiles, n),                 # row tiles outer, preds inner
            in_specs=[
                # one (t_rows, 128) prediction slab per inner step
                pl.BlockSpec((1, t_rows, _LANES), lambda t, i: (i, t, 0)),
                # gt / mask depend only on t -> resident across the inner loop
                pl.BlockSpec((t_rows, _LANES), lambda t, i: (t, 0)),
                pl.BlockSpec((t_rows, _LANES), lambda t, i: (t, 0)),
            ],
            out_specs=pl.BlockSpec((1, 1, 8, _LANES),
                                   lambda t, i: (t, i, 0, 0)),
        ),
        compiler_params=pltpu.CompilerParams(
            dimension_semantics=("parallel", "arbitrary"),
            vmem_limit_bytes=_VMEM_LIMIT),
    )(preds, gt, mask)

    # gamma ** (N - i - 1) weighting + mean denominator, on the tiny partials.
    weights = jnp.float32(gamma) ** jnp.arange(n - 1, -1, -1, dtype=jnp.float32)
    per_pred = jnp.sum(partials, axis=(0, 2, 3))            # (N,)
    return jnp.dot(per_pred, weights) * jnp.float32(1.0 / L)


def sequence_loss_ref(flow_preds, flow_gt, valid, gamma=0.8, max_flow=400.0):
    """Pure-JAX reference mirroring the PyTorch forward."""
    gt = jnp.where(jnp.isnan(flow_gt), 0.0, flow_gt)
    n = len(flow_preds)
    v = jnp.squeeze(valid, axis=1)
    mag = jnp.sqrt(jnp.sum(gt ** 2, axis=1))
    v = (v >= 0.5) & (mag < max_flow)
    loss = jnp.float32(0.0)
    for i in range(n):
        w = gamma ** (n - i - 1)
        i_loss = jnp.abs(flow_preds[i] - gt)
        loss = loss + w * jnp.mean(v[:, None].astype(jnp.float32) * i_loss)
    return loss


def _make_inputs(key, B, C, H, W, N):
    k_gt, k_valid, *k_preds = jax.random.split(key, 2 + N)
    flow_gt = 10.0 * jax.random.normal(k_gt, (B, C, H, W), dtype=jnp.float32)
    # inject NaNs and an over-max_flow magnitude to exercise both masks
    flow_gt = flow_gt.at[0, :, 0, 0].set(jnp.nan)
    flow_gt = flow_gt.at[min(1, B - 1), :, 3, 3].set(500.0)
    valid = (jax.random.uniform(k_valid, (B, 1, H, W), dtype=jnp.float32)
             > 0.2).astype(jnp.float32)
    flow_preds = [5.0 * jax.random.normal(k, (B, C, H, W), dtype=jnp.float32)
                  for k in k_preds]
    return flow_preds, flow_gt, valid


if __name__ == "__main__":
    key = jax.random.PRNGKey(0)
    B, C, H, W, N = 2, 2, 16, 16, 8

    flow_preds, flow_gt, valid = _make_inputs(key, B, C, H, W, N)

    # 1) default path: list input, L = 1024 -> 8 rows, single tile.
    loss = sequence_loss(flow_preds, flow_gt, valid, gamma=0.8, max_flow=400.0)
    jax.block_until_ready(loss)
    ref = sequence_loss_ref(flow_preds, flow_gt, valid, gamma=0.8, max_flow=400.0)
    assert jnp.allclose(loss, ref, rtol=1e-5, atol=1e-5), (loss, ref)

    # 2) pre-stacked predictions + forced small tile -> multiple row tiles and
    #    a partial last prediction block (L = 1280 -> 10 rows, tile_rows = 8).
    fp2, gt2, v2 = _make_inputs(jax.random.PRNGKey(1), B, C, 16, 20, N)
    loss2 = sequence_loss(jnp.stack(fp2, axis=0), gt2, v2, tile_rows=8)
    jax.block_until_ready(loss2)
    ref2 = sequence_loss_ref(fp2, gt2, v2)
    assert jnp.allclose(loss2, ref2, rtol=1e-5, atol=1e-5), (loss2, ref2)

    # 3) lane-unaligned element count (B*C*H*W = 450) -> pred zero-pad fallback.
    fp3, gt3, v3 = _make_inputs(jax.random.PRNGKey(2), 1, 2, 15, 15, 4)
    loss3 = sequence_loss(fp3, gt3, v3)
    jax.block_until_ready(loss3)
    ref3 = sequence_loss_ref(fp3, gt3, v3)
    assert jnp.allclose(loss3, ref3, rtol=1e-5, atol=1e-5), (loss3, ref3)

    # 4) bf16 predictions are streamed as-is (no wrapper cast); math in f32.
    preds_bf16 = [p.astype(jnp.bfloat16) for p in flow_preds]
    loss4 = sequence_loss(preds_bf16, flow_gt, valid)
    jax.block_until_ready(loss4)
    ref4 = sequence_loss_ref([p.astype(jnp.float32) for p in preds_bf16],
                             flow_gt, valid)
    assert jnp.allclose(loss4, ref4, rtol=1e-4, atol=1e-4), (loss4, ref4)

    print("KERNEL_OK")
</pallas_src>

<mosaic_0001>
module attributes {stable_mosaic.version = 11 : i64} {
  func.func @_sequence_loss_kernel(%arg0: i32, %arg1: i32, %arg2: memref<1x8x128xf32, #tpu.memory_space<vmem>>, %arg3: memref<8x128xf32, #tpu.memory_space<vmem>>, %arg4: memref<8x128xf32, #tpu.memory_space<vmem>>, %arg5: memref<1x1x8x128xf32, #tpu.memory_space<vmem>>) attributes {dimension_semantics = [#tpu.dimension_semantics<parallel>, #tpu.dimension_semantics<arbitrary>], iteration_bounds = array<i64: 1, 8>, scalar_prefetch = 0 : i64, scratch_operands = 0 : i64, tpu.core_type = #tpu.core_type<tc>, window_params = [{transform_indices = @transform_0, window_bounds = array<i64: 1, 8, 128>}, {transform_indices = @transform_1, window_bounds = array<i64: 8, 128>}, {transform_indices = @transform_2, window_bounds = array<i64: 8, 128>}, {transform_indices = @transform_3, window_bounds = array<i64: 1, 1, 8, 128>}]} {
    %c0 = arith.constant 0 : index
    %c0_0 = arith.constant 0 : index
    %c0_1 = arith.constant 0 : index
    %0 = vector.load %arg2[%c0, %c0_0, %c0_1] : memref<1x8x128xf32, #tpu.memory_space<vmem>>, vector<1x8x128xf32>
    %1 = vector.shape_cast %0 : vector<1x8x128xf32> to vector<8x128xf32>
    %c0_2 = arith.constant 0 : index
    %c0_3 = arith.constant 0 : index
    %2 = vector.load %arg3[%c0_2, %c0_3] : memref<8x128xf32, #tpu.memory_space<vmem>>, vector<8x128xf32>
    %3 = arith.subf %1, %2 : vector<8x128xf32>
    %4 = math.absf %3 : vector<8x128xf32>
    %c0_4 = arith.constant 0 : index
    %c0_5 = arith.constant 0 : index
    %5 = vector.load %arg4[%c0_4, %c0_5] : memref<8x128xf32, #tpu.memory_space<vmem>>, vector<8x128xf32>
    %cst = arith.constant 0.000000e+00 : f32
    %6 = vector.broadcast %cst : f32 to vector<8x128xf32>
    %7 = arith.cmpf ogt, %5, %6 : vector<8x128xf32>
    %cst_6 = arith.constant 0.000000e+00 : f32
    %8 = vector.broadcast %cst_6 : f32 to vector<8x128xf32>
    %9 = arith.select %7, %4, %8 : vector<8x128xi1>, vector<8x128xf32>
    %10 = vector.shape_cast %9 : vector<8x128xf32> to vector<1x8x128xf32>
    %cst_7 = arith.constant dense<0.000000e+00> : vector<8x128xf32>
    %11 = vector.multi_reduction <add>, %10, %cst_7 [0] : vector<1x8x128xf32> to vector<8x128xf32>
    %c0_8 = arith.constant 0 : index
    %c0_9 = arith.constant 0 : index
    %c0_10 = arith.constant 0 : index
    %c0_11 = arith.constant 0 : index
    %12 = vector.load %arg5[%c0_8, %c0_9, %c0_10, %c0_11] : memref<1x1x8x128xf32, #tpu.memory_space<vmem>>, vector<1x1x8x128xf32>
    %13 = vector.shape_cast %12 : vector<1x1x8x128xf32> to vector<8x128xf32>
    %14 = vector.shape_cast %11 : vector<8x128xf32> to vector<1x1x8x128xf32>
    tpu.vector_store %arg5[%c0_8, %c0_9, %c0_10, %c0_11], %14 {strides = array<i32>} : memref<1x1x8x128xf32, #tpu.memory_space<vmem>>, vector<1x1x8x128xf32>,
    return
  }
  func.func @transform_0(%arg0: i32, %arg1: i32) -> (i32, i32, i32) {
    %c0_i32 = arith.constant 0 : i32
    %c0_i32_0 = arith.constant 0 : i32
    return %arg1, %arg0, %c0_i32 : i32, i32, i32
  }
  func.func @transform_1(%arg0: i32, %arg1: i32) -> (i32, i32) {
    %c0_i32 = arith.constant 0 : i32
    %c0_i32_0 = arith.constant 0 : i32
    return %arg0, %c0_i32 : i32, i32
  }
  func.func @transform_2(%arg0: i32, %arg1: i32) -> (i32, i32) {
    %c0_i32 = arith.constant 0 : i32
    %c0_i32_0 = arith.constant 0 : i32
    return %arg0, %c0_i32 : i32, i32
  }
  func.func @transform_3(%arg0: i32, %arg1: i32) -> (i32, i32, i32, i32) {
    %c0_i32 = arith.constant 0 : i32
    %c0_i32_0 = arith.constant 0 : i32
    %c0_i32_1 = arith.constant 0 : i32
    return %arg0, %arg1, %c0_i32, %c0_i32_0 : i32, i32, i32, i32
  }
}

</mosaic_0001>

<llo_original>
// kernel: tpu_custom_call.1
$region0: #{tpu_custom_call.1}
  #allocation0 [shape = 'u32[]', space=smem, size = 0x4, offset = 0x4, fixed_abs, tag = 'smem constant byte address 0x4 - core index']
  #allocation1 [shape = 'u32[144,128]{1,0:T(1,128)}', space=vmem, size = 0x12000, scoped, tag = 'internal scratch']
  %s0 = inlined_call_operand.hbm [shape: f32[8,8,128], index: 0, kind: input, shape index: {}]
  %s1 = inlined_call_operand.hbm [shape: f32[8,128], index: 1, kind: input, shape index: {}]
  %s2 = inlined_call_operand.hbm [shape: f32[8,128], index: 2, kind: input, shape index: {}]
  %s3 = inlined_call_operand.hbm [shape: f32[1,8,8,128], index: 3, kind: output, shape index: {}]
  %s4 = sld [smem:[#allocation0]]
  $region57: #{tpu_custom_call.1} parent=0
    _
  %s6 = ssub.s32 1, %s4
  %s7 = scalar_select 0, %s6, %s4
  $region1: #{tpu_custom_call.1} parent=0
    #allocation2 [shape = 'u8[8192]{0}', space=vmem, size = 0x2000, scoped, tag = 'input window, operand 0']
    #allocation3 [shape = 's32[2]{0}', space=sflag, size = 0x8, scoped, tag = 'scoped memory for tpu_custom_call.1']
    #allocation4 [shape = 's32[2]{0}', space=sflag, size = 0x8, scoped, tag = 'scoped memory for tpu_custom_call.1']
    #allocation5 [shape = 'u8[4096]{0}', space=vmem, size = 0x1000, scoped, tag = 'input window, operand 1, single buffered']
    #allocation6 [shape = 's32[1]{0}', space=sflag, size = 0x4, scoped, tag = 'scoped memory for tpu_custom_call.1']
    #allocation7 [shape = 'u8[4096]{0}', space=vmem, size = 0x1000, scoped, tag = 'input window, operand 2, single buffered']
    #allocation8 [shape = 'u8[8192]{0}', space=vmem, size = 0x2000, scoped, tag = 'output window, operand 0']
    %8 = vsyncpa [#allocation3], 0
    %s9 = scalar_lea.sflag [#allocation3], 1
    %10 = vsyncpa %s9, 0
    %11 = vsyncpa [#allocation6], 0
    %12 = vsyncpa [#allocation4], 0
    %s13 = scalar_lea.sflag [#allocation4], 1
    %14 = vsyncpa %s13, 0
    loop: start=0, step=1, limit=10
    $region2: #{tpu_custom_call.1} parent=1 // loop_pre_header
      _
    $region3: #{tpu_custom_call.1} parent=1 // loop_header
      %s16 = sphi 0, %s20
      %p17 = scmp.ge.s32.totalorder %s16, 10
      %s23 = sphi 0, %s35
      %s24 = sphi 0, %s31
      %s25 = sphi 0, %s23
      %s26 = sphi 0, %s24
      %s27 = sphi 0, %s25
      %s28 = sphi 0, %s26
      %s40 = sphi 0, %s42
      %s43 = sphi 0, %s40
      %s44 = sphi 0, %s43
      %s60 = sphi 0, %s44
      %s66 = sphi 0, %s68
      %s69 = sphi 0, %s66
      %s70 = sphi 0, %s69
      %s86 = sphi 0, %s70
      %s92 = sphi 0, %s94
      %s95 = sphi 0, %s92
      %s96 = sphi 0, %s95
      %s112 = sphi 0, %s96
      %s120 = sphi 0, %s122
      %s123 = sphi 0, %s120
      %s124 = sphi 0, %s123
      %s140 = sphi 0, %s124
    $region4: #{tpu_custom_call.1} parent=1 // loop_header_branch
      %19 = sbr.rel (%p17) target = $region8
    $region5: #{tpu_custom_call.1} parent=1 // loop_body
      %s21 = ssub.s32 %s16, 1
      %s22 = ssub.s32 %s16, 2
      %s29 = sadd.s32 1, %s24
      %p30 = scmp.ge.s32.totalorder %s29, 8
      %s31 = scalar_select %p30, 0, %s29
      %s32 = sadd.s32 1, %s23
      %s33 = scalar_select %p30, %s32, %s23
      %p34 = scmp.ge.s32.totalorder %s33, 1
      %s35 = scalar_select %p34, 0, %s33
      %s36 = ssub.s32 %s24, %s31
      %s37 = ssub.s32 %s23, %s35
      %s38 = sor.u32 %s36, %s37
      %p39 = scmp.eq.s32.totalorder %s38, 0
      %s41 = sadd.s32 %s40, 1
      %s42 = scalar_select %p39, %s40, %s41
      %p45 = pneg %p39
      %p46 = scmp.eq.s32.totalorder %s16, 7
      %p47 = por %p45, %p46
      %p48 = scmp.ne.s32.totalorder %s40, %s43
      %p49 = scmp.eq.s32.totalorder %s16, 0
      %p50 = por %p48, %p49
      %p51 = scmp.ne.s32.totalorder %s40, %s43
      %p52 = scmp.eq.s32.totalorder %s21, 7
      %p53 = por %p51, %p52
      %p54 = scmp.ne.s32.totalorder %s43, %s44
      %p55 = scmp.eq.s32.totalorder %s21, 0
      %p56 = por %p54, %p55
      %p57 = scmp.ne.s32.totalorder %s43, %s44
      %p58 = scmp.eq.s32.totalorder %s22, 7
      %p59 = por %p57, %p58
      %p61 = scmp.ne.s32.totalorder %s44, %s60
      %p62 = scmp.eq.s32.totalorder %s22, 0
      %p63 = por %p61, %p62
      %s64 = ssub.s32 %s23, %s35
      %p65 = scmp.eq.s32.totalorder %s64, 0
      %s67 = sadd.s32 %s66, 1
      %s68 = scalar_select %p65, %s66, %s67
      %p71 = pneg %p65
      %p72 = scmp.eq.s32.totalorder %s16, 7
      %p73 = por %p71, %p72
      %p74 = scmp.ne.s32.totalorder %s66, %s69
      %p75 = scmp.eq.s32.totalorder %s16, 0
      %p76 = por %p74, %p75
      %p77 = scmp.ne.s32.totalorder %s66, %s69
      %p78 = scmp.eq.s32.totalorder %s21, 7
      %p79 = por %p77, %p78
      %p80 = scmp.ne.s32.totalorder %s69, %s70
      %p81 = scmp.eq.s32.totalorder %s21, 0
      %p82 = por %p80, %p81
      %p83 = scmp.ne.s32.totalorder %s69, %s70
      %p84 = scmp.eq.s32.totalorder %s22, 7
      %p85 = por %p83, %p84
      %p87 = scmp.ne.s32.totalorder %s70, %s86
      %p88 = scmp.eq.s32.totalorder %s22, 0
      %p89 = por %p87, %p88
      %s90 = ssub.s32 %s23, %s35
      %p91 = scmp.eq.s32.totalorder %s90, 0
      %s93 = sadd.s32 %s92, 1
      %s94 = scalar_select %p91, %s92, %s93
      %p97 = pneg %p91
      %p98 = scmp.eq.s32.totalorder %s16, 7
      %p99 = por %p97, %p98
      %p100 = scmp.ne.s32.totalorder %s92, %s95
      %p101 = scmp.eq.s32.totalorder %s16, 0
      %p102 = por %p100, %p101
      %p103 = scmp.ne.s32.totalorder %s92, %s95
      %p104 = scmp.eq.s32.totalorder %s21, 7
      %p105 = por %p103, %p104
      %p106 = scmp.ne.s32.totalorder %s95, %s96
      %p107 = scmp.eq.s32.totalorder %s21, 0
      %p108 = por %p106, %p107
      %p109 = scmp.ne.s32.totalorder %s95, %s96
      %p110 = scmp.eq.s32.totalorder %s22, 7
      %p111 = por %p109, %p110
      %p113 = scmp.ne.s32.totalorder %s96, %s112
      %p114 = scmp.eq.s32.totalorder %s22, 0
      %p115 = por %p113, %p114
      %s116 = ssub.s32 %s23, %s35
      %s117 = ssub.s32 %s24, %s31
      %s118 = sor.u32 %s116, %s117
      %p119 = scmp.eq.s32.totalorder %s118, 0
      %s121 = sadd.s32 %s120, 1
      %s122 = scalar_select %p119, %s120, %s121
      %p125 = pneg %p119
      %p126 = scmp.eq.s32.totalorder %s16, 7
      %p127 = por %p125, %p126
      %p128 = scmp.ne.s32.totalorder %s120, %s123
      %p129 = scmp.eq.s32.totalorder %s16, 0
      %p130 = por %p128, %p129
      %p131 = scmp.ne.s32.totalorder %s120, %s123
      %p132 = scmp.eq.s32.totalorder %s21, 7
      %p133 = por %p131, %p132
      %p134 = scmp.ne.s32.totalorder %s123, %s124
      %p135 = scmp.eq.s32.totalorder %s21, 0
      %p136 = por %p134, %p135
      %p137 = scmp.ne.s32.totalorder %s123, %s124
      %p138 = scmp.eq.s32.totalorder %s22, 7
      %p139 = por %p137, %p138
      %p141 = scmp.ne.s32.totalorder %s124, %s140
      %p142 = scmp.eq.s32.totalorder %s22, 0
      %p143 = por %p141, %p142
      %p144 = scmp.le.s32.totalorder 1, %s16
      %p145 = scmp.lt.s32.totalorder %s16, 9
      %p146 = pnand %p144, %p145
      %p147 = pneg %p146
      // Predicated region
      $region9: #{tpu_custom_call.1} parent=5 // pred_check
        _
      $region10: #{tpu_custom_call.1} parent=5 // pred_check_branch
        %149 = sbr.rel (%p146) target = $region12
      $region11: #{tpu_custom_call.1} parent=5 // pred_region
        %s150 = ssub.s32 %s16, 1
        // Predicated region
        $region13: #{tpu_custom_call.1} parent=11 // pred_check
          %p151 = pneg %p82
        $region14: #{tpu_custom_call.1} parent=11 // pred_check_branch
          %153 = sbr.rel (%p151) target = $region16
        $region15: #{tpu_custom_call.1} parent=11 // pred_region
          %s155 = ssub.s32 128, 128
          %156 = vsyncadd [#allocation6], %s155
          %s157 = smul.addr %s25, 128
          %s158 = scalar_lea.hbm %s1, %s157
          %s160 = sshll.u32 [#allocation5], 4
          %s161 = int_to_ptr.vmem [resolvable:$true] %s160
          %163 = dma.hbm_to_vmem [thread:$0]  %s158, 128, %s161, [#allocation6]
        $region16: #{tpu_custom_call.1} parent=11 // pred_fallthru
          _
        // Predicated region
        $region17: #{tpu_custom_call.1} parent=11 // pred_check
          %p164 = pneg %p108
        $region18: #{tpu_custom_call.1} parent=11 // pred_check_branch
          %166 = sbr.rel (%p164) target = $region20
        $region19: #{tpu_custom_call.1} parent=11 // pred_region
          %s168 = ssub.s32 128, 128
          %169 = vsyncadd [#allocation6], %s168
          %s170 = smul.addr %s25, 128
          %s171 = scalar_lea.hbm %s2, %s170
          %s173 = sshll.u32 [#allocation7], 4
          %s174 = int_to_ptr.vmem [resolvable:$true] %s173
          %176 = dma.hbm_to_vmem [thread:$0]  %s171, 128, %s174, [#allocation6]
        $region20: #{tpu_custom_call.1} parent=11 // pred_fallthru
          _
      $region12: #{tpu_custom_call.1} parent=5 // pred_fallthru
        _
      %p177 = scmp.lt.s32.totalorder %s16, 8
      // Predicated region
      $region21: #{tpu_custom_call.1} parent=5 // pred_check
        %p178 = pneg %p177
      $region22: #{tpu_custom_call.1} parent=5 // pred_check_branch
        %180 = sbr.rel (%p178) target = $region24
      $region23: #{tpu_custom_call.1} parent=5 // pred_region
        // Predicated region
        $region25: #{tpu_custom_call.1} parent=23 // pred_check
          %p181 = pneg %p50
        $region26: #{tpu_custom_call.1} parent=23 // pred_check_branch
          %183 = sbr.rel (%p181) target = $region28
        $region27: #{tpu_custom_call.1} parent=23 // pred_region
          %s184 = sand.u32 %s40, 1
          %s185 = scalar_lea.sflag [#allocation3], %s184
          %s186 = sand.u32 %s40, 1
          %s187 = smul.addr %s186, 8
          %s188 = scalar_lea.vmem [#allocation2], %s187
          %s190 = ssub.s32 128, 128
          %191 = vsyncadd %s185, %s190
          %s192 = sadd.s32 %s23, %s24
          %s193 = smul.addr %s192, 128
          %s194 = scalar_lea.hbm %s0, %s193
          %s196 = sshll.u32 %s188, 4
          %s197 = int_to_ptr.vmem [resolvable:$true] %s196
          %199 = dma.hbm_to_vmem [thread:$0]  %s194, 128, %s197, %s185
        $region28: #{tpu_custom_call.1} parent=23 // pred_fallthru
          _
      $region24: #{tpu_custom_call.1} parent=5 // pred_fallthru
        _
      %p200 = scmp.le.s32.totalorder 1, %s16
      %p201 = scmp.lt.s32.totalorder %s16, 9
      %p202 = pnand %p200, %p201
      %p203 = pneg %p202
      // Predicated region
      $region29: #{tpu_custom_call.1} parent=5 // pred_check
        _
      $region30: #{tpu_custom_call.1} parent=5 // pred_check_branch
        %205 = sbr.rel (%p202) target = $region32
      $region31: #{tpu_custom_call.1} parent=5 // pred_region
        %s206 = ssub.s32 %s16, 1
        %s207 = sand.u32 %s43, 1
        %s208 = scalar_lea.sflag [#allocation3], %s207
        %s209 = sand.u32 %s43, 1
        %s210 = smul.addr %s209, 8
        %s211 = scalar_lea.vmem [#allocation2], %s210
        // Predicated region
        $region33: #{tpu_custom_call.1} parent=31 // pred_check
          %p212 = pneg %p56
        $region34: #{tpu_custom_call.1} parent=31 // pred_check_branch
          %214 = sbr.rel (%p212) target = $region36
        $region35: #{tpu_custom_call.1} parent=31 // pred_region
          %215 = dma.done %s208, 128
        $region36: #{tpu_custom_call.1} parent=31 // pred_fallthru
          _
        // Predicated region
        $region37: #{tpu_custom_call.1} parent=31 // pred_check
          %p216 = pneg %p82
        $region38: #{tpu_custom_call.1} parent=31 // pred_check_branch
          %218 = sbr.rel (%p216) target = $region40
        $region39: #{tpu_custom_call.1} parent=31 // pred_region
          %219 = dma.done [#allocation6], 128
        $region40: #{tpu_custom_call.1} parent=31 // pred_fallthru
          _
        // Predicated region
        $region41: #{tpu_custom_call.1} parent=31 // pred_check
          %p220 = pneg %p108
        $region42: #{tpu_custom_call.1} parent=31 // pred_check_branch
          %222 = sbr.rel (%p220) target = $region44
        $region43: #{tpu_custom_call.1} parent=31 // pred_region
          %223 = dma.done [#allocation6], 128
        $region44: #{tpu_custom_call.1} parent=31 // pred_fallthru
          _
        %s224 = sand.u32 %s43, 1
        %s225 = scalar_lea.sflag [#allocation3], %s224
        %s226 = sand.u32 %s43, 1
        %s227 = smul.addr %s226, 8
        %s228 = scalar_lea.vmem [#allocation2], %s227
        %p229 = pneg %p56
        %p230 = pneg %p53
        %p231 = pneg %p82
        %p232 = pneg %p79
        %p233 = pneg %p108
        %p234 = pneg %p105
        %p235 = pneg %p136
        %p236 = pneg %p133
        %s237 = sand.u32 %s123, 1
        %s238 = scalar_lea.sflag [#allocation4], %s237
        %s239 = sand.u32 %s123, 1
        %s240 = smul.addr %s239, 8
        %s241 = scalar_lea.vmem [#allocation8], %s240
        %v242 = vld [vmem:[%s211] sm:$0xff]
        %v243 = vld [vmem:[#allocation5] sm:$0xff]
        %v244 = vsub.f32 %v242, %v243
        %v245 = vand.u32 2147483647, %v244
        %v246 = vld [vmem:[#allocation7] sm:$0xff]
        %vm247 = vcmp.gt.f32.partialorder %v246, 0.0
        %v248 = vsel %vm247, %v245, 0.0
        %v249 = vadd.f32 %v248, 0.0
        %250 = vst [vmem:[%s241] sm:$0xff] %v249
        %s251 = sand.u32 %s123, 1
        %s252 = scalar_lea.sflag [#allocation4], %s251
        %s253 = sand.u32 %s123, 1
        %s254 = smul.addr %s253, 8
        %s255 = scalar_lea.vmem [#allocation8], %s254
        // Predicated region
        $region45: #{tpu_custom_call.1} parent=31 // pred_check
          %p256 = pneg %p133
        $region46: #{tpu_custom_call.1} parent=31 // pred_check_branch
          %258 = sbr.rel (%p256) target = $region48
        $region47: #{tpu_custom_call.1} parent=31 // pred_region
          %s260 = ssub.s32 128, 128
          %261 = vsyncadd %s252, %s260
          %s262 = smul.addr %s25, 8
          %s263 = sadd.s32 %s26, %s262
          %s264 = smul.addr %s263, 128
          %s265 = scalar_lea.hbm %s3, %s264
          %s267 = sshll.u32 %s255, 4
          %s268 = int_to_ptr.vmem [resolvable:$true] %s267
          %270 = dma.vmem_to_hbm [thread:$0]  %s268, 128, %s265, %s252
        $region48: #{tpu_custom_call.1} parent=31 // pred_fallthru
          _
      $region32: #{tpu_custom_call.1} parent=5 // pred_fallthru
        _
      %p271 = scmp.le.s32.totalorder 2, %s16
      // Predicated region
      $region49: #{tpu_custom_call.1} parent=5 // pred_check
        %p272 = pneg %p271
      $region50: #{tpu_custom_call.1} parent=5 // pred_check_branch
        %274 = sbr.rel (%p272) target = $region52
      $region51: #{tpu_custom_call.1} parent=5 // pred_region
        %s275 = ssub.s32 %s16, 2
        // Predicated region
        $region53: #{tpu_custom_call.1} parent=51 // pred_check
          %p276 = pneg %p139
        $region54: #{tpu_custom_call.1} parent=51 // pred_check_branch
          %278 = sbr.rel (%p276) target = $region56
        $region55: #{tpu_custom_call.1} parent=51 // pred_region
          %s279 = sand.u32 %s124, 1
          %s280 = scalar_lea.sflag [#allocation4], %s279
          %s281 = sand.u32 %s124, 1
          %s282 = smul.addr %s281, 8
          %s283 = scalar_lea.vmem [#allocation8], %s282
          %284 = dma.done %s280, 128
        $region56: #{tpu_custom_call.1} parent=51 // pred_fallthru
          _
      $region52: #{tpu_custom_call.1} parent=5 // pred_fallthru
        _
    $region6: #{tpu_custom_call.1} parent=1 // loop_footer
      %s20 = sadd.s32 1, %s16
    $region7: #{tpu_custom_call.1} parent=1 // loop_footer_branch
      %15 = sbr.rel target = $region3
    $region8: #{tpu_custom_call.1} parent=1 // loop_exit
      _
    %285 = vsyncpa [#allocation3], 1
    %s286 = scalar_lea.sflag [#allocation3], 1
    %287 = vsyncpa %s286, 1
    %288 = vsyncpa [#allocation6], 1
    %289 = vsyncpa [#allocation4], 1
    %s290 = scalar_lea.sflag [#allocation4], 1
    %291 = vsyncpa %s290, 1

</llo_original>
